<compile_context>
chip_gen: v7x
topology: tpu7x:2x2x1
jax: 0.10.0
libtpu: 0.0.40
codegen_flags: <defaults>
</compile_context>

<pallas_src>
import functools

import jax
import jax.numpy as jnp
from jax.experimental import pallas as pl
from jax.experimental.pallas import tpu as pltpu

BN_EPS = 1e-5


# ------------------------------ Pallas kernel --------------------------------

def _shift_flat(x, d):
    """y[:, m] = x[:, m + d], zero-filled where m + d is out of range."""
    c, m = x.shape
    if d == 0:
        return x
    if d < 0:
        pad = jnp.zeros((c, -d), x.dtype)
        return jnp.concatenate([pad, x[:, : m + d]], axis=1)
    pad = jnp.zeros((c, d), x.dtype)
    return jnp.concatenate([x[:, d:], pad], axis=1)


def _crossconv_kernel(x_ref, w1_ref, b1_ref, w2_ref, b2_ref, o_ref,
                      *, width, ksize, cmid, cout, add):
    """Fused CrossConv on one image.

    x_ref : (C1, M) channels-first, M = H*W (spatial on the lane axis)
    w1_ref: (k, cmid, C1)  per-tap (1,k)-conv weights, BN scale folded in
    b1_ref: (cmid, 1)      BN bias of cv1
    w2_ref: (k, cout, cmid) per-tap (k,1)-conv weights, BN scale folded in
    b2_ref: (cout, 1)      BN bias of cv2
    o_ref : (cout, M)
    """
    x = x_ref[...].astype(jnp.float32)                      # (C1, M)
    m = x.shape[1]
    half = ksize // 2
    # w-coordinate of every flattened spatial position (row-major, stride=W).
    col = jax.lax.broadcasted_iota(jnp.int32, (1, m), 1) % width

    # ---- cv1: (1, k) conv along W  (+ folded BN bias, SiLU) ----
    y = jnp.zeros((cmid, m), jnp.float32)
    for t in range(ksize):
        dt = t - half                                       # tap offset along W
        xt = _shift_flat(x, dt)                             # x[:, m + dt]
        if dt < 0:                                          # invalid where w + dt < 0
            xt = jnp.where(col >= -dt, xt, 0.0)
        elif dt > 0:                                        # invalid where w + dt >= W
            xt = jnp.where(col < width - dt, xt, 0.0)
        y = y + jnp.dot(w1_ref[t], xt, preferred_element_type=jnp.float32)
    y = y + b1_ref[...]
    h1 = y * jax.nn.sigmoid(y)                              # SiLU; stays on-chip

    # ---- cv2: (k, 1) conv along H  (+ folded BN bias, SiLU) ----
    # Row shift = +-width in the flat index; the zero fill of _shift_flat is
    # exactly the zero padding along H, so no extra mask is needed.
    z = jnp.zeros((cout, m), jnp.float32)
    for t in range(ksize):
        dt = t - half
        ht = _shift_flat(h1, dt * width)
        z = z + jnp.dot(w2_ref[t], ht, preferred_element_type=jnp.float32)
    z = z + b2_ref[...]
    out = z * jax.nn.sigmoid(z)

    if add:                                                 # shortcut (c1 == c2)
        out = out + x
    o_ref[...] = out.astype(o_ref.dtype)


def crossconv_forward(x_nchw, params):
    """CrossConv forward. x_nchw: (N, C1, H, W) -> (N, C2, H, W)."""
    n, c1, h, w = x_nchw.shape
    m = h * w
    k = params["k"]
    cmid = params["b1"].shape[0]
    cout = params["b2"].shape[0]
    add = params["add"]

    x2 = x_nchw.reshape(n, c1, m)          # channels-first, spatial on lanes

    kernel = functools.partial(
        _crossconv_kernel, width=w, ksize=k, cmid=cmid, cout=cout, add=add)

    out2 = pl.pallas_call(
        kernel,
        out_shape=jax.ShapeDtypeStruct((n, cout, m), x_nchw.dtype),
        grid=(n,),
        in_specs=[
            pl.BlockSpec((pl.Squeezed(), c1, m), lambda i: (i, 0, 0)),
            pl.BlockSpec((k, cmid, c1), lambda i: (0, 0, 0)),
            pl.BlockSpec((cmid, 1), lambda i: (0, 0)),
            pl.BlockSpec((k, cout, cmid), lambda i: (0, 0, 0)),
            pl.BlockSpec((cout, 1), lambda i: (0, 0)),
        ],
        out_specs=pl.BlockSpec((pl.Squeezed(), cout, m), lambda i: (i, 0, 0)),
        compiler_params=pltpu.CompilerParams(dimension_semantics=("parallel",)),
    )(x2, params["w1_taps"], params["b1"], params["w2_taps"], params["b2"])

    return out2.reshape(n, cout, h, w)


# ----------------------------- parameter handling -----------------------------

def make_crossconv_params(key, c1, c2, k=3, e=1.0, shortcut=False):
    """Deterministic CrossConv parameters (Conv weights + inference BatchNorm)."""
    c_ = int(c2 * e)
    k1, k2, k3, k4, k5, k6 = jax.random.split(key, 6)
    w1 = 0.1 * jax.random.normal(k1, (c_, c1, 1, k), jnp.float32)   # cv1: OIHW (1,k)
    g1 = 1.0 + 0.1 * jax.random.normal(k2, (c_,), jnp.float32)
    beta1 = 0.1 * jax.random.normal(k3, (c_,), jnp.float32)
    w2 = 0.1 * jax.random.normal(k4, (c2, c_, k, 1), jnp.float32)   # cv2: OIHW (k,1)
    g2 = 1.0 + 0.1 * jax.random.normal(k5, (c2,), jnp.float32)
    beta2 = 0.1 * jax.random.normal(k6, (c2,), jnp.float32)

    # Inference BatchNorm (running_mean=0, running_var=1) -> per-channel scale/bias.
    s1 = g1 / jnp.sqrt(1.0 + BN_EPS)
    s2 = g2 / jnp.sqrt(1.0 + BN_EPS)
    b1 = beta1                      # beta - mean * scale, mean == 0
    b2 = beta2

    # Fold the BN scale into the conv weights (kernel epilogue = bias + SiLU only).
    w1f = w1 * s1[:, None, None, None]
    w2f = w2 * s2[:, None, None, None]

    # Per-tap matrices in "out = W @ x" layout for the channels-first (C, H*W) view.
    w1_taps = jnp.transpose(w1f[:, :, 0, :], (2, 0, 1))   # (k, c_, c1)
    w2_taps = jnp.transpose(w2f[:, :, :, 0], (2, 0, 1))   # (k, c2, c_)

    return {
        "k": k, "add": bool(shortcut and c1 == c2),
        # kernel-side (folded) parameters
        "w1_taps": w1_taps, "b1": b1.reshape(c_, 1),
        "w2_taps": w2_taps, "b2": b2.reshape(c2, 1),
        # reference-side parameters
        "w1": w1, "w2": w2, "w1_folded": w1f, "w2_folded": w2f,
        "s1": s1, "s2": s2, "b1v": b1, "b2v": b2,
    }


# --------------------------- pure-JAX reference (NCHW) ------------------------

def _conv_bn_silu_ref(x, w, scale, bias, pad):
    y = jax.lax.conv_general_dilated(
        x, w, window_strides=(1, 1),
        padding=[(pad[0], pad[0]), (pad[1], pad[1])],
        dimension_numbers=("NCHW", "OIHW", "NCHW"))
    y = y * scale[None, :, None, None] + bias[None, :, None, None]
    return y * jax.nn.sigmoid(y)


def crossconv_ref(x, p, folded):
    """folded=True: BN scale pre-folded into the weights (same rounding path as
    the kernel, algebraically identical). folded=False: literal module math
    (conv -> BN affine -> SiLU)."""
    half = p["k"] // 2
    if folded:
        w1, s1 = p["w1_folded"], jnp.ones_like(p["s1"])
        w2, s2 = p["w2_folded"], jnp.ones_like(p["s2"])
    else:
        w1, s1, w2, s2 = p["w1"], p["s1"], p["w2"], p["s2"]
    y = _conv_bn_silu_ref(x, w1, s1, p["b1v"], (0, half))      # cv1: (1,k), pad (0,k//2)
    y = _conv_bn_silu_ref(y, w2, s2, p["b2v"], (half, 0))      # cv2: (k,1), pad (k//2,0)
    return x + y if p["add"] else y


# ------------------------------------ main ------------------------------------

if __name__ == "__main__":
    key = jax.random.PRNGKey(0)
    kx, kp0, kp1 = jax.random.split(key, 3)

    N, C1, C2 = 2, 4, 4
    # Default CrossConv config: k=3, s=1, g=1, e=1.0, shortcut=False.
    p_plain = make_crossconv_params(kp0, C1, C2, k=3, e=1.0, shortcut=False)
    # Shortcut variant (c1 == c2): residual add fused into the same kernel.
    p_short = make_crossconv_params(kp1, C1, C2, k=3, e=1.0, shortcut=True)

    for (H, W) in ((16, 16), (16, 8)):      # square + non-square spatial
        x = jax.random.normal(kx, (N, C1, H, W), jnp.float32)   # NCHW
        for p in (p_plain, p_short):
            out = jax.block_until_ready(crossconv_forward(x, p))
            assert out.shape == (N, C2, H, W), out.shape
            ref_f = jax.block_until_ready(crossconv_ref(x, p, folded=True))
            ref_e = jax.block_until_ready(crossconv_ref(x, p, folded=False))
            err_f = float(jnp.max(jnp.abs(out - ref_f)))
            err_e = float(jnp.max(jnp.abs(out - ref_e)))
            assert err_f < 1e-4, err_f   # identical rounding path -> tight
            assert err_e < 5e-3, err_e   # literal (unfolded) module math

    print("KERNEL_OK")
</pallas_src>

<mosaic_0001>
module attributes {stable_mosaic.version = 11 : i64} {
  func.func @_crossconv_kernel(%arg0: i32, %arg1: memref<1x4x256xf32, #tpu.memory_space<vmem>>, %arg2: memref<3x4x4xf32, #tpu.memory_space<vmem>>, %arg3: memref<4x1xf32, #tpu.memory_space<vmem>>, %arg4: memref<3x4x4xf32, #tpu.memory_space<vmem>>, %arg5: memref<4x1xf32, #tpu.memory_space<vmem>>, %arg6: memref<1x4x256xf32, #tpu.memory_space<vmem>>) attributes {dimension_semantics = [#tpu.dimension_semantics<parallel>], iteration_bounds = array<i64: 2>, scalar_prefetch = 0 : i64, scratch_operands = 0 : i64, tpu.core_type = #tpu.core_type<tc>, window_params = [{transform_indices = @transform_0, window_bounds = array<i64: 1, 4, 256>}, {pipeline_mode = #tpu.pipeline_mode<synchronous>, transform_indices = @transform_1, window_bounds = array<i64: 3, 4, 4>}, {pipeline_mode = #tpu.pipeline_mode<synchronous>, transform_indices = @transform_2, window_bounds = array<i64: 4, 1>}, {pipeline_mode = #tpu.pipeline_mode<synchronous>, transform_indices = @transform_3, window_bounds = array<i64: 3, 4, 4>}, {pipeline_mode = #tpu.pipeline_mode<synchronous>, transform_indices = @transform_4, window_bounds = array<i64: 4, 1>}, {transform_indices = @transform_5, window_bounds = array<i64: 1, 4, 256>}]} {
    %c0 = arith.constant 0 : index
    %c0_0 = arith.constant 0 : index
    %c0_1 = arith.constant 0 : index
    %0 = vector.load %arg1[%c0, %c0_0, %c0_1] : memref<1x4x256xf32, #tpu.memory_space<vmem>>, vector<1x4x256xf32>
    %1 = vector.shape_cast %0 : vector<1x4x256xf32> to vector<4x256xf32>
    %2 = tpu.iota {dimensions = array<i32: 1>} : vector<1x256xi32>
    %c16_i32 = arith.constant 16 : i32
    %c0_i32 = arith.constant 0 : i32
    %3 = arith.cmpi eq, %c16_i32, %c0_i32 : i32
    %c1_i32 = arith.constant 1 : i32
    %4 = arith.select %3, %c1_i32, %c16_i32 : i32
    %5 = vector.broadcast %4 : i32 to vector<1x256xi32>
    %6 = arith.remsi %2, %5 : vector<1x256xi32>
    %c0_i32_2 = arith.constant 0 : i32
    %7 = vector.broadcast %c0_i32_2 : i32 to vector<1x256xi32>
    %8 = arith.cmpi ne, %6, %7 : vector<1x256xi32>
    %c0_i32_3 = arith.constant 0 : i32
    %9 = vector.broadcast %c0_i32_3 : i32 to vector<1x256xi32>
    %10 = arith.cmpi slt, %6, %9 : vector<1x256xi32>
    %c0_i32_4 = arith.constant 0 : i32
    %11 = arith.cmpi slt, %4, %c0_i32_4 : i32
    %12 = vector.broadcast %11 : i1 to vector<1x256xi1>
    %13 = vector.broadcast %12 : vector<1x256xi1> to vector<1x256xi1>
    %14 = arith.xori %10, %13 : vector<1x256xi1>
    %15 = arith.andi %14, %8 : vector<1x256xi1>
    %16 = vector.broadcast %4 : i32 to vector<1x256xi32>
    %17 = arith.addi %6, %16 : vector<1x256xi32>
    %18 = arith.select %15, %17, %6 : vector<1x256xi1>, vector<1x256xi32>
    %cst = arith.constant 0.000000e+00 : f32
    %19 = vector.broadcast %cst : f32 to vector<4x256xf32>
    %cst_5 = arith.constant 0.000000e+00 : f32
    %20 = vector.broadcast %cst_5 : f32 to vector<4x1xf32>
    %21 = vector.extract_strided_slice %1 {offsets = [0, 0], sizes = [4, 255], strides = [1, 1]} : vector<4x256xf32> to vector<4x255xf32>
    %22 = tpu.concatenate %20, %21 in 1 : vector<4x1xf32>, vector<4x255xf32> -> vector<4x256xf32>
    %c1_i32_6 = arith.constant 1 : i32
    %23 = vector.broadcast %c1_i32_6 : i32 to vector<1x256xi32>
    %24 = arith.cmpi sge, %18, %23 : vector<1x256xi32>
    %cst_7 = arith.constant 0.000000e+00 : f32
    %25 = vector.shape_cast %24 : vector<1x256xi1> to vector<1x256xi1>
    %26 = vector.broadcast %25 : vector<1x256xi1> to vector<4x256xi1>
    %27 = vector.broadcast %cst_7 : f32 to vector<4x256xf32>
    %28 = arith.select %26, %22, %27 : vector<4x256xi1>, vector<4x256xf32>
    %c0_8 = arith.constant 0 : index
    %c0_9 = arith.constant 0 : index
    %c0_10 = arith.constant 0 : index
    %29 = vector.load %arg2[%c0_8, %c0_9, %c0_10] : memref<3x4x4xf32, #tpu.memory_space<vmem>>, vector<1x4x4xf32>
    %30 = vector.shape_cast %29 : vector<1x4x4xf32> to vector<4x4xf32>
    %cst_11 = arith.constant dense<0.000000e+00> : vector<4x256xf32>
    %31 = tpu.matmul %30, %28, %cst_11 {dimension_numbers = #tpu.dot_dimension_numbers<[1], [0], [0], [1], [0, 0, 1, 1], [], []>} : vector<4x4xf32>, vector<4x256xf32>, vector<4x256xf32> -> vector<4x256xf32>
    %32 = arith.addf %19, %31 : vector<4x256xf32>
    %c1 = arith.constant 1 : index
    %c0_12 = arith.constant 0 : index
    %c0_13 = arith.constant 0 : index
    %33 = vector.load %arg2[%c1, %c0_12, %c0_13] : memref<3x4x4xf32, #tpu.memory_space<vmem>>, vector<1x4x4xf32>
    %34 = vector.shape_cast %33 : vector<1x4x4xf32> to vector<4x4xf32>
    %cst_14 = arith.constant dense<0.000000e+00> : vector<4x256xf32>
    %35 = tpu.matmul %34, %1, %cst_14 {dimension_numbers = #tpu.dot_dimension_numbers<[1], [0], [0], [1], [0, 0, 1, 1], [], []>} : vector<4x4xf32>, vector<4x256xf32>, vector<4x256xf32> -> vector<4x256xf32>
    %36 = arith.addf %32, %35 : vector<4x256xf32>
    %cst_15 = arith.constant 0.000000e+00 : f32
    %37 = vector.broadcast %cst_15 : f32 to vector<4x1xf32>
    %38 = vector.extract_strided_slice %1 {offsets = [0, 1], sizes = [4, 255], strides = [1, 1]} : vector<4x256xf32> to vector<4x255xf32>
    %39 = tpu.concatenate %38, %37 in 1 : vector<4x255xf32>, vector<4x1xf32> -> vector<4x256xf32>
    %c15_i32 = arith.constant 15 : i32
    %40 = vector.broadcast %c15_i32 : i32 to vector<1x256xi32>
    %41 = arith.cmpi slt, %18, %40 : vector<1x256xi32>
    %cst_16 = arith.constant 0.000000e+00 : f32
    %42 = vector.shape_cast %41 : vector<1x256xi1> to vector<1x256xi1>
    %43 = vector.broadcast %42 : vector<1x256xi1> to vector<4x256xi1>
    %44 = vector.broadcast %cst_16 : f32 to vector<4x256xf32>
    %45 = arith.select %43, %39, %44 : vector<4x256xi1>, vector<4x256xf32>
    %c2 = arith.constant 2 : index
    %c0_17 = arith.constant 0 : index
    %c0_18 = arith.constant 0 : index
    %46 = vector.load %arg2[%c2, %c0_17, %c0_18] : memref<3x4x4xf32, #tpu.memory_space<vmem>>, vector<1x4x4xf32>
    %47 = vector.shape_cast %46 : vector<1x4x4xf32> to vector<4x4xf32>
    %cst_19 = arith.constant dense<0.000000e+00> : vector<4x256xf32>
    %48 = tpu.matmul %47, %45, %cst_19 {dimension_numbers = #tpu.dot_dimension_numbers<[1], [0], [0], [1], [0, 0, 1, 1], [], []>} : vector<4x4xf32>, vector<4x256xf32>, vector<4x256xf32> -> vector<4x256xf32>
    %49 = arith.addf %36, %48 : vector<4x256xf32>
    %c0_20 = arith.constant 0 : index
    %c0_21 = arith.constant 0 : index
    %50 = vector.load %arg3[%c0_20, %c0_21] : memref<4x1xf32, #tpu.memory_space<vmem>>, vector<4x1xf32>
    %51 = vector.broadcast %50 : vector<4x1xf32> to vector<4x256xf32>
    %52 = arith.addf %49, %51 : vector<4x256xf32>
    %53 = arith.negf %52 : vector<4x256xf32>
    %54 = math.exp %53 : vector<4x256xf32>
    %cst_22 = arith.constant 1.000000e+00 : f32
    %55 = vector.broadcast %cst_22 : f32 to vector<4x256xf32>
    %56 = arith.addf %55, %54 : vector<4x256xf32>
    %57 = arith.divf %55, %56 : vector<4x256xf32>
    %58 = arith.mulf %52, %57 : vector<4x256xf32>
    %cst_23 = arith.constant 0.000000e+00 : f32
    %59 = vector.broadcast %cst_23 : f32 to vector<4x256xf32>
    %cst_24 = arith.constant 0.000000e+00 : f32
    %60 = vector.broadcast %cst_24 : f32 to vector<4x16xf32>
    %61 = vector.extract_strided_slice %58 {offsets = [0, 0], sizes = [4, 240], strides = [1, 1]} : vector<4x256xf32> to vector<4x240xf32>
    %62 = tpu.concatenate %60, %61 in 1 : vector<4x16xf32>, vector<4x240xf32> -> vector<4x256xf32>
    %c0_25 = arith.constant 0 : index
    %c0_26 = arith.constant 0 : index
    %c0_27 = arith.constant 0 : index
    %63 = vector.load %arg4[%c0_25, %c0_26, %c0_27] : memref<3x4x4xf32, #tpu.memory_space<vmem>>, vector<1x4x4xf32>
    %64 = vector.shape_cast %63 : vector<1x4x4xf32> to vector<4x4xf32>
    %cst_28 = arith.constant dense<0.000000e+00> : vector<4x256xf32>
    %65 = tpu.matmul %64, %62, %cst_28 {dimension_numbers = #tpu.dot_dimension_numbers<[1], [0], [0], [1], [0, 0, 1, 1], [], []>} : vector<4x4xf32>, vector<4x256xf32>, vector<4x256xf32> -> vector<4x256xf32>
    %66 = arith.addf %59, %65 : vector<4x256xf32>
    %c1_29 = arith.constant 1 : index
    %c0_30 = arith.constant 0 : index
    %c0_31 = arith.constant 0 : index
    %67 = vector.load %arg4[%c1_29, %c0_30, %c0_31] : memref<3x4x4xf32, #tpu.memory_space<vmem>>, vector<1x4x4xf32>
    %68 = vector.shape_cast %67 : vector<1x4x4xf32> to vector<4x4xf32>
    %cst_32 = arith.constant dense<0.000000e+00> : vector<4x256xf32>
    %69 = tpu.matmul %68, %58, %cst_32 {dimension_numbers = #tpu.dot_dimension_numbers<[1], [0], [0], [1], [0, 0, 1, 1], [], []>} : vector<4x4xf32>, vector<4x256xf32>, vector<4x256xf32> -> vector<4x256xf32>
    %70 = arith.addf %66, %69 : vector<4x256xf32>
    %cst_33 = arith.constant 0.000000e+00 : f32
    %71 = vector.broadcast %cst_33 : f32 to vector<4x16xf32>
    %72 = vector.extract_strided_slice %58 {offsets = [0, 16], sizes = [4, 240], strides = [1, 1]} : vector<4x256xf32> to vector<4x240xf32>
    %73 = tpu.concatenate %72, %71 in 1 : vector<4x240xf32>, vector<4x16xf32> -> vector<4x256xf32>
    %c2_34 = arith.constant 2 : index
    %c0_35 = arith.constant 0 : index
    %c0_36 = arith.constant 0 : index
    %74 = vector.load %arg4[%c2_34, %c0_35, %c0_36] : memref<3x4x4xf32, #tpu.memory_space<vmem>>, vector<1x4x4xf32>
    %75 = vector.shape_cast %74 : vector<1x4x4xf32> to vector<4x4xf32>
    %cst_37 = arith.constant dense<0.000000e+00> : vector<4x256xf32>
    %76 = tpu.matmul %75, %73, %cst_37 {dimension_numbers = #tpu.dot_dimension_numbers<[1], [0], [0], [1], [0, 0, 1, 1], [], []>} : vector<4x4xf32>, vector<4x256xf32>, vector<4x256xf32> -> vector<4x256xf32>
    %77 = arith.addf %70, %76 : vector<4x256xf32>
    %c0_38 = arith.constant 0 : index
    %c0_39 = arith.constant 0 : index
    %78 = vector.load %arg5[%c0_38, %c0_39] : memref<4x1xf32, #tpu.memory_space<vmem>>, vector<4x1xf32>
    %79 = vector.broadcast %78 : vector<4x1xf32> to vector<4x256xf32>
    %80 = arith.addf %77, %79 : vector<4x256xf32>
    %81 = arith.negf %80 : vector<4x256xf32>
    %82 = math.exp %81 : vector<4x256xf32>
    %cst_40 = arith.constant 1.000000e+00 : f32
    %83 = vector.broadcast %cst_40 : f32 to vector<4x256xf32>
    %84 = arith.addf %83, %82 : vector<4x256xf32>
    %85 = arith.divf %83, %84 : vector<4x256xf32>
    %86 = arith.mulf %80, %85 : vector<4x256xf32>
    %c0_41 = arith.constant 0 : index
    %c0_42 = arith.constant 0 : index
    %c0_43 = arith.constant 0 : index
    %87 = vector.load %arg6[%c0_41, %c0_42, %c0_43] : memref<1x4x256xf32, #tpu.memory_space<vmem>>, vector<1x4x256xf32>
    %88 = vector.shape_cast %87 : vector<1x4x256xf32> to vector<4x256xf32>
    %89 = vector.shape_cast %86 : vector<4x256xf32> to vector<1x4x256xf32>
    tpu.vector_store %arg6[%c0_41, %c0_42, %c0_43], %89 {strides = array<i32>} : memref<1x4x256xf32, #tpu.memory_space<vmem>>, vector<1x4x256xf32>,
    return
  }
  func.func @transform_0(%arg0: i32) -> (i32, i32, i32) {
    %c0_i32 = arith.constant 0 : i32
    %c0_i32_0 = arith.constant 0 : i32
    %c0_i32_1 = arith.constant 0 : i32
    return %arg0, %c0_i32, %c0_i32_0 : i32, i32, i32
  }
  func.func @transform_1(%arg0: i32) -> (i32, i32, i32) {
    %c0_i32 = arith.constant 0 : i32
    %c0_i32_0 = arith.constant 0 : i32
    %c0_i32_1 = arith.constant 0 : i32
    %c0_i32_2 = arith.constant 0 : i32
    return %c0_i32, %c0_i32_0, %c0_i32_1 : i32, i32, i32
  }
  func.func @transform_2(%arg0: i32) -> (i32, i32) {
    %c0_i32 = arith.constant 0 : i32
    %c0_i32_0 = arith.constant 0 : i32
    %c0_i32_1 = arith.constant 0 : i32
    return %c0_i32, %c0_i32_0 : i32, i32
  }
  func.func @transform_3(%arg0: i32) -> (i32, i32, i32) {
    %c0_i32 = arith.constant 0 : i32
    %c0_i32_0 = arith.constant 0 : i32
    %c0_i32_1 = arith.constant 0 : i32
    %c0_i32_2 = arith.constant 0 : i32
    return %c0_i32, %c0_i32_0, %c0_i32_1 : i32, i32, i32
  }
  func.func @transform_4(%arg0: i32) -> (i32, i32) {
    %c0_i32 = arith.constant 0 : i32
    %c0_i32_0 = arith.constant 0 : i32
    %c0_i32_1 = arith.constant 0 : i32
    return %c0_i32, %c0_i32_0 : i32, i32
  }
  func.func @transform_5(%arg0: i32) -> (i32, i32, i32) {
    %c0_i32 = arith.constant 0 : i32
    %c0_i32_0 = arith.constant 0 : i32
    %c0_i32_1 = arith.constant 0 : i32
    return %arg0, %c0_i32, %c0_i32_0 : i32, i32, i32
  }
}

</mosaic_0001>

<llo_original>
// kernel: tpu_custom_call.1
$region0: #{tpu_custom_call.1}
  #allocation0 [shape = 'u32[]', space=smem, size = 0x4, offset = 0x4, fixed_abs, tag = 'smem constant byte address 0x4 - core index']
  #allocation1 [shape = 'u32[144,128]{1,0:T(1,128)}', space=vmem, size = 0x12000, scoped, tag = 'internal scratch']
  %s0 = inlined_call_operand.hbm [shape: f32[2,4,256], index: 0, kind: input, shape index: {}]
  %s1 = inlined_call_operand.vmem [shape: f32[3,4,4], index: 1, kind: input, shape index: {}]
  %s2 = inlined_call_operand.vmem [shape: f32[4,1], index: 2, kind: input, shape index: {}]
  %s3 = inlined_call_operand.hbm [shape: f32[3,4,4], index: 3, kind: input, shape index: {}]
  %s4 = inlined_call_operand.vmem [shape: f32[4,1], index: 4, kind: input, shape index: {}]
  %s5 = inlined_call_operand.hbm [shape: f32[2,4,256], index: 5, kind: output, shape index: {}]
  %s6 = sld [smem:[#allocation0]]
  $region61: #{tpu_custom_call.1} parent=0
    _
  %s8 = ssub.s32 1, %s6
  %s9 = scalar_select 0, %s8, %s6
  $region1: #{tpu_custom_call.1} parent=0
    #allocation2 [shape = 'u8[8192]{0}', space=vmem, size = 0x2000, scoped, tag = 'input window, operand 0']
    #allocation3 [shape = 's32[2]{0}', space=sflag, size = 0x8, scoped, tag = 'scoped memory for tpu_custom_call.1']
    #allocation4 [shape = 's32[2]{0}', space=sflag, size = 0x8, scoped, tag = 'scoped memory for tpu_custom_call.1']
    #allocation5 [shape = 'u8[6144]{0}', space=vmem, size = 0x1800, scoped, tag = 'input window, operand 3, single buffered']
    #allocation6 [shape = 's32[1]{0}', space=sflag, size = 0x4, scoped, tag = 'scoped memory for tpu_custom_call.1']
    #allocation7 [shape = 'u8[8192]{0}', space=vmem, size = 0x2000, scoped, tag = 'output window, operand 0']
    %10 = vsyncpa [#allocation3], 0
    %s11 = scalar_lea.sflag [#allocation3], 1
    %12 = vsyncpa %s11, 0
    %13 = vsyncpa [#allocation6], 0
    %14 = vsyncpa [#allocation4], 0
    %s15 = scalar_lea.sflag [#allocation4], 1
    %16 = vsyncpa %s15, 0
    loop: start=0, step=1, limit=4
    $region2: #{tpu_custom_call.1} parent=1 // loop_pre_header
      _
    $region3: #{tpu_custom_call.1} parent=1 // loop_header
      %s18 = sphi 0, %s22
      %p19 = scmp.ge.s32.totalorder %s18, 4
      %s28 = sphi 0, %s30
      %s31 = sphi 0, %s28
      %s32 = sphi 0, %s31
      %s48 = sphi 0, %s32
      %s52 = sphi 0, %s52
      %s54 = sphi 0, %s52
      %s55 = sphi 0, %s54
      %s69 = sphi 0, %s55
      %s73 = sphi 0, %s73
      %s75 = sphi 0, %s73
      %s76 = sphi 0, %s75
      %s90 = sphi 0, %s76
      %s94 = sphi 0, %s94
      %s96 = sphi 0, %s94
      %s97 = sphi 0, %s96
      %s111 = sphi 0, %s97
      %s115 = sphi 0, %s115
      %s117 = sphi 0, %s115
      %s118 = sphi 0, %s117
      %s132 = sphi 0, %s118
      %s138 = sphi 0, %s140
      %s141 = sphi 0, %s138
      %s142 = sphi 0, %s141
      %s158 = sphi 0, %s142
    $region4: #{tpu_custom_call.1} parent=1 // loop_header_branch
      %21 = sbr.rel (%p19) target = $region8
    $region5: #{tpu_custom_call.1} parent=1 // loop_body
      %s23 = ssub.s32 %s18, 1
      %s24 = ssub.s32 %s18, 2
      %s25 = sadd.s32 %s18, 1
      %s26 = ssub.s32 %s18, %s25
      %p27 = scmp.eq.s32.totalorder %s26, 0
      %s29 = sadd.s32 %s28, 1
      %s30 = scalar_select %p27, %s28, %s29
      %p33 = pneg %p27
      %p34 = scmp.eq.s32.totalorder %s18, 1
      %p35 = por %p33, %p34
      %p36 = scmp.ne.s32.totalorder %s28, %s31
      %p37 = scmp.eq.s32.totalorder %s18, 0
      %p38 = por %p36, %p37
      %p39 = scmp.ne.s32.totalorder %s28, %s31
      %p40 = scmp.eq.s32.totalorder %s23, 1
      %p41 = por %p39, %p40
      %p42 = scmp.ne.s32.totalorder %s31, %s32
      %p43 = scmp.eq.s32.totalorder %s23, 0
      %p44 = por %p42, %p43
      %p45 = scmp.ne.s32.totalorder %s31, %s32
      %p46 = scmp.eq.s32.totalorder %s24, 1
      %p47 = por %p45, %p46
      %p49 = scmp.ne.s32.totalorder %s32, %s48
      %p50 = scmp.eq.s32.totalorder %s24, 0
      %p51 = por %p49, %p50
      %s53 = sadd.s32 %s52, 1
      %p56 = scmp.eq.s32.totalorder %s18, 1
      %p57 = scmp.ne.s32.totalorder %s52, %s54
      %p58 = scmp.eq.s32.totalorder %s18, 0
      %p59 = por %p57, %p58
      %p60 = scmp.ne.s32.totalorder %s52, %s54
      %p61 = scmp.eq.s32.totalorder %s23, 1
      %p62 = por %p60, %p61
      %p63 = scmp.ne.s32.totalorder %s54, %s55
      %p64 = scmp.eq.s32.totalorder %s23, 0
      %p65 = por %p63, %p64
      %p66 = scmp.ne.s32.totalorder %s54, %s55
      %p67 = scmp.eq.s32.totalorder %s24, 1
      %p68 = por %p66, %p67
      %p70 = scmp.ne.s32.totalorder %s55, %s69
      %p71 = scmp.eq.s32.totalorder %s24, 0
      %p72 = por %p70, %p71
      %s74 = sadd.s32 %s73, 1
      %p77 = scmp.eq.s32.totalorder %s18, 1
      %p78 = scmp.ne.s32.totalorder %s73, %s75
      %p79 = scmp.eq.s32.totalorder %s18, 0
      %p80 = por %p78, %p79
      %p81 = scmp.ne.s32.totalorder %s73, %s75
      %p82 = scmp.eq.s32.totalorder %s23, 1
      %p83 = por %p81, %p82
      %p84 = scmp.ne.s32.totalorder %s75, %s76
      %p85 = scmp.eq.s32.totalorder %s23, 0
      %p86 = por %p84, %p85
      %p87 = scmp.ne.s32.totalorder %s75, %s76
      %p88 = scmp.eq.s32.totalorder %s24, 1
      %p89 = por %p87, %p88
      %p91 = scmp.ne.s32.totalorder %s76, %s90
      %p92 = scmp.eq.s32.totalorder %s24, 0
      %p93 = por %p91, %p92
      %s95 = sadd.s32 %s94, 1
      %p98 = scmp.eq.s32.totalorder %s18, 1
      %p99 = scmp.ne.s32.totalorder %s94, %s96
      %p100 = scmp.eq.s32.totalorder %s18, 0
      %p101 = por %p99, %p100
      %p102 = scmp.ne.s32.totalorder %s94, %s96
      %p103 = scmp.eq.s32.totalorder %s23, 1
      %p104 = por %p102, %p103
      %p105 = scmp.ne.s32.totalorder %s96, %s97
      %p106 = scmp.eq.s32.totalorder %s23, 0
      %p107 = por %p105, %p106
      %p108 = scmp.ne.s32.totalorder %s96, %s97
      %p109 = scmp.eq.s32.totalorder %s24, 1
      %p110 = por %p108, %p109
      %p112 = scmp.ne.s32.totalorder %s97, %s111
      %p113 = scmp.eq.s32.totalorder %s24, 0
      %p114 = por %p112, %p113
      %s116 = sadd.s32 %s115, 1
      %p119 = scmp.eq.s32.totalorder %s18, 1
      %p120 = scmp.ne.s32.totalorder %s115, %s117
      %p121 = scmp.eq.s32.totalorder %s18, 0
      %p122 = por %p120, %p121
      %p123 = scmp.ne.s32.totalorder %s115, %s117
      %p124 = scmp.eq.s32.totalorder %s23, 1
      %p125 = por %p123, %p124
      %p126 = scmp.ne.s32.totalorder %s117, %s118
      %p127 = scmp.eq.s32.totalorder %s23, 0
      %p128 = por %p126, %p127
      %p129 = scmp.ne.s32.totalorder %s117, %s118
      %p130 = scmp.eq.s32.totalorder %s24, 1
      %p131 = por %p129, %p130
      %p133 = scmp.ne.s32.totalorder %s118, %s132
      %p134 = scmp.eq.s32.totalorder %s24, 0
      %p135 = por %p133, %p134
      %s136 = ssub.s32 %s18, %s25
      %p137 = scmp.eq.s32.totalorder %s136, 0
      %s139 = sadd.s32 %s138, 1
      %s140 = scalar_select %p137, %s138, %s139
      %p143 = pneg %p137
      %p144 = scmp.eq.s32.totalorder %s18, 1
      %p145 = por %p143, %p144
      %p146 = scmp.ne.s32.totalorder %s138, %s141
      %p147 = scmp.eq.s32.totalorder %s18, 0
      %p148 = por %p146, %p147
      %p149 = scmp.ne.s32.totalorder %s138, %s141
      %p150 = scmp.eq.s32.totalorder %s23, 1
      %p151 = por %p149, %p150
      %p152 = scmp.ne.s32.totalorder %s141, %s142
      %p153 = scmp.eq.s32.totalorder %s23, 0
      %p154 = por %p152, %p153
      %p155 = scmp.ne.s32.totalorder %s141, %s142
      %p156 = scmp.eq.s32.totalorder %s24, 1
      %p157 = por %p155, %p156
      %p159 = scmp.ne.s32.totalorder %s142, %s158
      %p160 = scmp.eq.s32.totalorder %s24, 0
      %p161 = por %p159, %p160
      %p162 = scmp.le.s32.totalorder 1, %s18
      %p163 = scmp.lt.s32.totalorder %s18, 3
      %p164 = pnand %p162, %p163
      %p165 = pneg %p164
      // Predicated region
      $region9: #{tpu_custom_call.1} parent=5 // pred_check
        _
      $region10: #{tpu_custom_call.1} parent=5 // pred_check_branch
        %167 = sbr.rel (%p164) target = $region12
      $region11: #{tpu_custom_call.1} parent=5 // pred_region
        %s168 = ssub.s32 %s18, 1
        // Predicated region
        $region13: #{tpu_custom_call.1} parent=11 // pred_check
          %p169 = pneg %p65
        $region14: #{tpu_custom_call.1} parent=11 // pred_check_branch
          %171 = sbr.rel (%p169) target = $region16
        $region15: #{tpu_custom_call.1} parent=11 // pred_region
          _
        $region16: #{tpu_custom_call.1} parent=11 // pred_fallthru
          _
        // Predicated region
        $region17: #{tpu_custom_call.1} parent=11 // pred_check
          %p172 = pneg %p86
        $region18: #{tpu_custom_call.1} parent=11 // pred_check_branch
          %174 = sbr.rel (%p172) target = $region20
        $region19: #{tpu_custom_call.1} parent=11 // pred_region
          _
        $region20: #{tpu_custom_call.1} parent=11 // pred_fallthru
          _
        // Predicated region
        $region21: #{tpu_custom_call.1} parent=11 // pred_check
          %p175 = pneg %p107
        $region22: #{tpu_custom_call.1} parent=11 // pred_check_branch
          %177 = sbr.rel (%p175) target = $region24
        $region23: #{tpu_custom_call.1} parent=11 // pred_region
          %s179 = ssub.s32 192, 192
          %180 = vsyncadd [#allocation6], %s179
          %s181 = sshll.u32 [#allocation5], 4
          %s182 = int_to_ptr.vmem [resolvable:$true] %s181
          %187 = dma.hbm_to_vmem [thread:$0]  %s3, 192, %s182, [#allocation6], 64, 64, 4
        $region24: #{tpu_custom_call.1} parent=11 // pred_fallthru
          _
        // Predicated region
        $region25: #{tpu_custom_call.1} parent=11 // pred_check
          %p188 = pneg %p128
        $region26: #{tpu_custom_call.1} parent=11 // pred_check_branch
          %190 = sbr.rel (%p188) target = $region28
        $region27: #{tpu_custom_call.1} parent=11 // pred_region
          _
        $region28: #{tpu_custom_call.1} parent=11 // pred_fallthru
          _
      $region12: #{tpu_custom_call.1} parent=5 // pred_fallthru
        _
      %p191 = scmp.lt.s32.totalorder %s18, 2
      // Predicated region
      $region29: #{tpu_custom_call.1} parent=5 // pred_check
        %p192 = pneg %p191
      $region30: #{tpu_custom_call.1} parent=5 // pred_check_branch
        %194 = sbr.rel (%p192) target = $region32
      $region31: #{tpu_custom_call.1} parent=5 // pred_region
        // Predicated region
        $region33: #{tpu_custom_call.1} parent=31 // pred_check
          %p195 = pneg %p38
        $region34: #{tpu_custom_call.1} parent=31 // pred_check_branch
          %197 = sbr.rel (%p195) target = $region36
        $region35: #{tpu_custom_call.1} parent=31 // pred_region
          %s198 = sand.u32 %s28, 1
          %s199 = scalar_lea.sflag [#allocation3], %s198
          %s200 = sand.u32 %s28, 1
          %s201 = smul.addr %s200, 8
          %s202 = scalar_lea.vmem [#allocation2], %s201
          %s204 = ssub.s32 128, 128
          %205 = vsyncadd %s199, %s204
          %s206 = smul.addr %s18, 2
          %s207 = smul.addr %s206, 64
          %s208 = scalar_lea.hbm %s0, %s207
          %s210 = sshll.u32 %s202, 4
          %s211 = int_to_ptr.vmem [resolvable:$true] %s210
          %213 = dma.hbm_to_vmem [thread:$0]  %s208, 128, %s211, %s199
        $region36: #{tpu_custom_call.1} parent=31 // pred_fallthru
          _
      $region32: #{tpu_custom_call.1} parent=5 // pred_fallthru
        _
      %p214 = scmp.le.s32.totalorder 1, %s18
      %p215 = scmp.lt.s32.totalorder %s18, 3
      %p216 = pnand %p214, %p215
      %p217 = pneg %p216
      // Predicated region
      $region37: #{tpu_custom_call.1} parent=5 // pred_check
        _
      $region38: #{tpu_custom_call.1} parent=5 // pred_check_branch
        %219 = sbr.rel (%p216) target = $region40
      $region39: #{tpu_custom_call.1} parent=5 // pred_region
        %s220 = ssub.s32 %s18, 1
        %s221 = sand.u32 %s31, 1
        %s222 = scalar_lea.sflag [#allocation3], %s221
        %s223 = sand.u32 %s31, 1
        %s224 = smul.addr %s223, 8
        %s225 = scalar_lea.vmem [#allocation2], %s224
        // Predicated region
        $region41: #{tpu_custom_call.1} parent=39 // pred_check
          %p226 = pneg %p44
        $region42: #{tpu_custom_call.1} parent=39 // pred_check_branch
          %228 = sbr.rel (%p226) target = $region44
        $region43: #{tpu_custom_call.1} parent=39 // pred_region
          %229 = dma.done %s222, 128
        $region44: #{tpu_custom_call.1} parent=39 // pred_fallthru
          _
        // Predicated region
        $region45: #{tpu_custom_call.1} parent=39 // pred_check
          %p230 = pneg %p107
        $region46: #{tpu_custom_call.1} parent=39 // pred_check_branch
          %232 = sbr.rel (%p230) target = $region48
        $region47: #{tpu_custom_call.1} parent=39 // pred_region
          %233 = dma.done [#allocation6], 192
        $region48: #{tpu_custom_call.1} parent=39 // pred_fallthru
          _
        %s234 = sand.u32 %s31, 1
        %s235 = scalar_lea.sflag [#allocation3], %s234
        %s236 = sand.u32 %s31, 1
        %s237 = smul.addr %s236, 8
        %s238 = scalar_lea.vmem [#allocation2], %s237
        %p239 = pneg %p44
        %p240 = pneg %p41
        %p241 = pneg %p65
        %p242 = pneg %p62
        %p243 = pneg %p86
        %p244 = pneg %p83
        %p245 = pneg %p107
        %p246 = pneg %p104
        %p247 = pneg %p128
        %p248 = pneg %p125
        %p249 = pneg %p154
        %p250 = pneg %p151
        %s251 = sand.u32 %s141, 1
        %s252 = scalar_lea.sflag [#allocation4], %s251
        %s253 = sand.u32 %s141, 1
        %s254 = smul.addr %s253, 8
        %s255 = scalar_lea.vmem [#allocation7], %s254
        %v256 = vld [vmem:[%s225] sm:$0xff]
        %v257 = vlaneseq
        %v258 = vand.u32 %v257, 127
        %v259 = vadd.s32 %v258, 128
        %vm260 = vcmp.lt.s32.totalorder %v258, 0
        %v261 = vsub.s32 0, %v258
        %v262 = vsel %vm260, %v261, %v258
        %v263 = vshrl.u32 %v262, 4
        %v264 = vand.u32 %v262, 15
        %v265 = vsub.s32 0, %v264
        %v266 = vsel %vm260, %v265, %v264
        %vm267 = vcmp.lt.s32.totalorder %v259, 0
        %v268 = vsub.s32 0, %v259
        %v269 = vsel %vm267, %v268, %v259
        %v270 = vshrl.u32 %v269, 4
        %v271 = vand.u32 %v269, 15
        %v272 = vsub.s32 0, %v271
        %v273 = vsel %vm267, %v272, %v271
        %vm274 = vcmp.ne.s32.totalorder %v266, 0
        %vm275 = vcmp.ne.s32.totalorder %v273, 0
        %vm276 = vcmp.lt.s32.totalorder %v266, 0
        %vm277 = vcmp.lt.s32.totalorder %v273, 0
        %vm278 = vmand %vm276, %vm274
        %vm279 = vmand %vm277, %vm275
        %v280 = vadd.s32 %v266, 16
        %v281 = vadd.s32 %v273, 16
        %v282 = vsel %vm278, %v280, %v266
        %v283 = vsel %vm279, %v281, %v273
        %v285 = vcombine.high %v256, %v256
        %286 = vrot.lane.b32.xlu0 %v256, 1
        %v287 = vpop.permute.xlu0 %286
        %288 = vrot.lane.b32.xlu0 %v285, 1
        %v289 = vpop.permute.xlu0 %288
        %vm290 = vcmask 7168
        %v291 = vsel %vm290, %v287, %v289
        %v294 = vsel %vm290, 0.0, %v287
        %vm295 = vcmp.ge.s32.totalorder %v282, 1
        %vm296 = vcmp.ge.s32.totalorder %v283, 1
        %v297 = vsel %vm295, 1, 0
        %v298 = vsel %vm296, 1, 0
        %vm299 = vcmp.eq.s32.totalorder %v297, 1
        %vm300 = vcmp.eq.s32.totalorder %v298, 1
        %v301 = vsel %vm299, %v294, 0.0
        %v302 = vsel %vm300, %v291, 0.0
        %v303 = vld [vmem:[%s1] sm:$0xf]
        %s304 = scalar_lea.vmem %s1, 4
        %v305 = vld [vmem:[%s304] sm:$0xf]
        %vm306 = vcmask 31744
        %v308 = vsel %vm306, %v305, 0
        %vm310 = vcmask 1043456
        %v311 = vsel %vm310, %v256, 0
        %v313 = vsel %vm310, %v285, 0
        %315 = vmatprep.subr.mxu0 %v313
        %316 = vmatpush1.msra.mxu0 %v311
        %317 = vmatprep.subr.mxu0 0.0
        %318 = vmatpush1.msra.mxu0 0.0
        %319 = vmatprep.subr.mxu0 0.0
        %320 = vmatpush1.msra.mxu0 0.0
        %321 = vmatprep.subr.mxu0 0.0
        %322 = vmatpush1.msra.mxu0 0.0
        %323 = vmatprep.subr.mxu0 0.0
        %324 = vmatpush1.msra.mxu0 0.0
        %325 = vmatprep.subr.mxu0 0.0
        %326 = vmatpush1.msra.mxu0 0.0
        %327 = vmatprep.subr.mxu0 0.0
        %328 = vmatpush1.msra.mxu0 0.0
        %329 = vmatprep.subr.mxu0 0.0
        %330 = vmatpush1.msra.mxu0 0.0
        %331 = vmatprep.subr.mxu0 0.0
        %332 = vmatpush1.msra.mxu0 0.0
        %333 = vmatprep.subr.mxu0 0.0
        %334 = vmatpush1.msra.mxu0 0.0
        %335 = vmatprep.subr.mxu0 0.0
        %336 = vmatpush1.msra.mxu0 0.0
        %337 = vmatprep.subr.mxu0 0.0
        %338 = vmatpush1.msra.mxu0 0.0
        %339 = vmatprep.subr.mxu0 0.0
        %340 = vmatpush1.msra.mxu0 0.0
        %341 = vmatprep.subr.mxu0 0.0
        %342 = vmatpush1.msra.mxu0 0.0
        %343 = vmatprep.subr.mxu0 0.0
        %344 = vmatpush1.msra.mxu0 0.0
        %345 = vmatprep.subr.mxu0 0.0
        %346 = vmatpush1.msra.mxu0 0.0
        %347 = vmatprep.subr.mxu0 0.0
        %348 = vmatpush1.msra.mxu0 0.0
        %349 = vmatprep.subr.mxu0 0.0
        %350 = vmatpush1.msra.mxu0 0.0
        %351 = vmatprep.subr.mxu0 0.0
        %352 = vmatpush1.msra.mxu0 0.0
        %353 = vmatprep.subr.mxu0 0.0
        %354 = vmatpush1.msra.mxu0 0.0
        %355 = vmatprep.subr.mxu0 0.0
        %356 = vmatpush1.msra.mxu0 0.0
        %357 = vmatprep.subr.mxu0 0.0
        %358 = vmatpush1.msra.mxu0 0.0
        %359 = vmatprep.subr.mxu0 0.0
        %360 = vmatpush1.msra.mxu0 0.0
        %361 = vmatprep.subr.mxu0 0.0
        %362 = vmatpush1.msra.mxu0 0.0
        %363 = vmatprep.subr.mxu0 0.0
        %364 = vmatpush1.msra.mxu0 0.0
        %365 = vmatprep.subr.mxu0 0.0
        %366 = vmatpush1.msra.mxu0 0.0
        %367 = vmatprep.subr.mxu0 0.0
        %368 = vmatpush1.msra.mxu0 0.0
        %369 = vmatprep.subr.mxu0 0.0
        %370 = vmatpush1.msra.mxu0 0.0
        %371 = vmatprep.subr.mxu0 0.0
        %372 = vmatpush1.msra.mxu0 0.0
        %373 = vmatprep.subr.mxu0 0.0
        %374 = vmatpush1.msra.mxu0 0.0
        %375 = vmatprep.subr.mxu0 0.0
        %376 = vmatpush1.msra.mxu0 0.0
        %377 = vmatprep.subr.mxu0 0.0
        %378 = vmatpush1.msra.mxu0 0.0
        %379 = vmatprep.mubr.f32.mxu0 0.0
        %380 = vmatmul.mubr.f32.gmra.mrb[0].mxu0 %v308
        %v381 = vpop.f32.mrb[0].mxu0
        %v382 = vadd.f32 0.0, %v381
        %v383 = vpop.f32.mrb[0].mxu0
        %v384 = vadd.f32 0.0, %v383
        %385 = vdwg.mxu0
        %v387 = vsel %vm306, %v303, 0
        %v390 = vsel %vm310, %v301, 0
        %v393 = vsel %vm310, %v302, 0
        %395 = vmatprep.subr.mxu0 %v393
        %396 = vmatpush1.msra.mxu0 %v390
        %397 = vmatprep.subr.mxu0 0.0
        %398 = vmatpush1.msra.mxu0 0.0
        %399 = vmatprep.subr.mxu0 0.0
        %400 = vmatpush1.msra.mxu0 0.0
        %401 = vmatprep.subr.mxu0 0.0
        %402 = vmatpush1.msra.mxu0 0.0
        %403 = vmatprep.subr.mxu0 0.0
        %404 = vmatpush1.msra.mxu0 0.0
        %405 = vmatprep.subr.mxu0 0.0
        %406 = vmatpush1.msra.mxu0 0.0
        %407 = vmatprep.subr.mxu0 0.0
        %408 = vmatpush1.msra.mxu0 0.0
        %409 = vmatprep.subr.mxu0 0.0
        %410 = vmatpush1.msra.mxu0 0.0
        %411 = vmatprep.subr.mxu0 0.0
        %412 = vmatpush1.msra.mxu0 0.0
        %413 = vmatprep.subr.mxu0 0.0
        %414 = vmatpush1.msra.mxu0 0.0
        %415 = vmatprep.subr.mxu0 0.0
        %416 = vmatpush1.msra.mxu0 0.0
        %417 = vmatprep.subr.mxu0 0.0
        %418 = vmatpush1.msra.mxu0 0.0
        %419 = vmatprep.subr.mxu0 0.0
        %420 = vmatpush1.msra.mxu0 0.0
        %421 = vmatprep.subr.mxu0 0.0
        %422 = vmatpush1.msra.mxu0 0.0
        %423 = vmatprep.subr.mxu0 0.0
        %424 = vmatpush1.msra.mxu0 0.0
        %425 = vmatprep.subr.mxu0 0.0
        %426 = vmatpush1.msra.mxu0 0.0
        %427 = vmatprep.subr.mxu0 0.0
        %428 = vmatpush1.msra.mxu0 0.0
        %429 = vmatprep.subr.mxu0 0.0
        %430 = vmatpush1.msra.mxu0 0.0
        %431 = vmatprep.subr.mxu0 0.0
        %432 = vmatpush1.msra.mxu0 0.0
        %433 = vmatprep.subr.mxu0 0.0
        %434 = vmatpush1.msra.mxu0 0.0
        %435 = vmatprep.subr.mxu0 0.0
        %436 = vmatpush1.msra.mxu0 0.0
        %437 = vmatprep.subr.mxu0 0.0
        %438 = vmatpush1.msra.mxu0 0.0
        %439 = vmatprep.subr.mxu0 0.0
        %440 = vmatpush1.msra.mxu0 0.0
        %441 = vmatprep.subr.mxu0 0.0
        %442 = vmatpush1.msra.mxu0 0.0
        %443 = vmatprep.subr.mxu0 0.0
        %444 = vmatpush1.msra.mxu0 0.0
        %445 = vmatprep.subr.mxu0 0.0
        %446 = vmatpush1.msra.mxu0 0.0
        %447 = vmatprep.subr.mxu0 0.0
        %448 = vmatpush1.msra.mxu0 0.0
        %449 = vmatprep.subr.mxu0 0.0
        %450 = vmatpush1.msra.mxu0 0.0
        %451 = vmatprep.subr.mxu0 0.0
        %452 = vmatpush1.msra.mxu0 0.0
        %453 = vmatprep.subr.mxu0 0.0
        %454 = vmatpush1.msra.mxu0 0.0
        %455 = vmatprep.subr.mxu0 0.0
        %456 = vmatpush1.msra.mxu0 0.0
        %457 = vmatprep.subr.mxu0 0.0
        %458 = vmatpush1.msra.mxu0 0.0
        %459 = vmatprep.mubr.f32.mxu0 0.0
        %460 = vmatmul.mubr.f32.gmra.mrb[0].mxu0 %v387
        %v461 = vpop.f32.mrb[0].mxu0
        %v462 = vadd.f32 %v382, %v461
        %v463 = vpop.f32.mrb[0].mxu0
        %v464 = vadd.f32 %v384, %v463
        %465 = vdwg.mxu0
        %466 = vrot.lane.b32.xlu0 %v256, 127
        %v467 = vpop.permute.xlu0 %466
        %468 = vrot.lane.b32.xlu0 %v285, 127
        %v469 = vpop.permute.xlu0 %468
        %vm470 = vcmask 1039360
        %v471 = vsel %vm470, %v467, %v469
        %v474 = vsel %vm470, %v469, 0.0
        %vm475 = vcmp.lt.s32.totalorder %v282, 15
        %vm476 = vcmp.lt.s32.totalorder %v283, 15
        %v477 = vsel %vm475, 1, 0
        %v478 = vsel %vm476, 1, 0
        %vm479 = vcmp.eq.s32.totalorder %v477, 1
        %vm480 = vcmp.eq.s32.totalorder %v478, 1
        %v481 = vsel %vm479, %v471, 0.0
        %v482 = vsel %vm480, %v474, 0.0
        %s483 = scalar_lea.vmem %s1, 8
        %v484 = vld [vmem:[%s483] sm:$0xf]
        %v486 = vsel %vm306, %v484, 0
        %v489 = vsel %vm310, %v481, 0
        %v492 = vsel %vm310, %v482, 0
        %494 = vmatprep.subr.mxu0 %v492
        %495 = vmatpush1.msra.mxu0 %v489
        %496 = vmatprep.subr.mxu0 0.0
        %497 = vmatpush1.msra.mxu0 0.0
        %498 = vmatprep.subr.mxu0 0.0
        %499 = vmatpush1.msra.mxu0 0.0
        %500 = vmatprep.subr.mxu0 0.0
        %501 = vmatpush1.msra.mxu0 0.0
        %502 = vmatprep.subr.mxu0 0.0
        %503 = vmatpush1.msra.mxu0 0.0
        %504 = vmatprep.subr.mxu0 0.0
        %505 = vmatpush1.msra.mxu0 0.0
        %506 = vmatprep.subr.mxu0 0.0
        %507 = vmatpush1.msra.mxu0 0.0
        %508 = vmatprep.subr.mxu0 0.0
        %509 = vmatpush1.msra.mxu0 0.0
        %510 = vmatprep.subr.mxu0 0.0
        %511 = vmatpush1.msra.mxu0 0.0
        %512 = vmatprep.subr.mxu0 0.0
        %513 = vmatpush1.msra.mxu0 0.0
        %514 = vmatprep.subr.mxu0 0.0
        %515 = vmatpush1.msra.mxu0 0.0
        %516 = vmatprep.subr.mxu0 0.0
        %517 = vmatpush1.msra.mxu0 0.0
        %518 = vmatprep.subr.mxu0 0.0
        %519 = vmatpush1.msra.mxu0 0.0
        %520 = vmatprep.subr.mxu0 0.0
        %521 = vmatpush1.msra.mxu0 0.0
        %522 = vmatprep.subr.mxu0 0.0
        %523 = vmatpush1.msra.mxu0 0.0
        %524 = vmatprep.subr.mxu0 0.0
        %525 = vmatpush1.msra.mxu0 0.0
        %526 = vmatprep.subr.mxu0 0.0
        %527 = vmatpush1.msra.mxu0 0.0
        %528 = vmatprep.subr.mxu0 0.0
        %529 = vmatpush1.msra.mxu0 0.0
        %530 = vmatprep.subr.mxu0 0.0
        %531 = vmatpush1.msra.mxu0 0.0
        %532 = vmatprep.subr.mxu0 0.0
        %533 = vmatpush1.msra.mxu0 0.0
        %534 = vmatprep.subr.mxu0 0.0
        %535 = vmatpush1.msra.mxu0 0.0
        %536 = vmatprep.subr.mxu0 0.0
        %537 = vmatpush1.msra.mxu0 0.0
        %538 = vmatprep.subr.mxu0 0.0
        %539 = vmatpush1.msra.mxu0 0.0
        %540 = vmatprep.subr.mxu0 0.0
        %541 = vmatpush1.msra.mxu0 0.0
        %542 = vmatprep.subr.mxu0 0.0
        %543 = vmatpush1.msra.mxu0 0.0
        %544 = vmatprep.subr.mxu0 0.0
        %545 = vmatpush1.msra.mxu0 0.0
        %546 = vmatprep.subr.mxu0 0.0
        %547 = vmatpush1.msra.mxu0 0.0
        %548 = vmatprep.subr.mxu0 0.0
        %549 = vmatpush1.msra.mxu0 0.0
        %550 = vmatprep.subr.mxu0 0.0
        %551 = vmatpush1.msra.mxu0 0.0
        %552 = vmatprep.subr.mxu0 0.0
        %553 = vmatpush1.msra.mxu0 0.0
        %554 = vmatprep.subr.mxu0 0.0
        %555 = vmatpush1.msra.mxu0 0.0
        %556 = vmatprep.subr.mxu0 0.0
        %557 = vmatpush1.msra.mxu0 0.0
        %558 = vmatprep.mubr.f32.mxu0 0.0
        %559 = vmatmul.mubr.f32.gmra.mrb[0].mxu0 %v486
        %v560 = vpop.f32.mrb[0].mxu0
        %v561 = vadd.f32 0.0, %v560
        %v562 = vpop.f32.mrb[0].mxu0
        %v563 = vadd.f32 0.0, %v562
        %564 = vdwg.mxu0
        %v565 = vadd.f32 %v462, %v561
        %v566 = vadd.f32 %v464, %v563
        %v567 = vld [vmem:[%s2] sm:$0xf]
        %569 = vset.pattern.permute.xlu0 0
        %570 = vperm.xlu0 %569, %v567
        %v571 = vpop.permute.xlu0 %570
        %v573 = vadd.f32 %v565, %v571
        %v574 = vadd.f32 %v566, %v571
        %v575 = vxor.u32 %v573, 2147483648
        %v576 = vxor.u32 %v574, 2147483648
        %v577 = vmul.f32 %v575, 1.442695
        %v578 = vpow.pop %v577
        %v579 = vmul.f32 %v576, 1.442695
        %v580 = vpow.pop %v579
        %v581 = vadd.f32 %v578, 1.0
        %v582 = vadd.f32 %v580, 1.0
        %v583 = vrcp.pop %v581
        %v584 = vmul.f32 1.0, %v583
        %v585 = vrcp.pop %v582
        %v586 = vmul.f32 1.0, %v585
        %v587 = vmul.f32 %v573, %v584
        %v588 = vmul.f32 %v574, %v586
        %591 = vrot.lane.b32.xlu0 %v587, 16
        %v592 = vpop.permute.xlu0 %591
        %593 = vrot.lane.b32.xlu0 %v588, 16
        %v594 = vpop.permute.xlu0 %593
        %vm595 = vcmask 130048
        %v596 = vsel %vm595, %v592, %v594
        %v598 = vsel %vm595, 0.0, %v592
        %v599 = vld [vmem:[#allocation5] sm:$0xf]
        %s600 = scalar_lea.vmem [#allocation5], 4
        %v601 = vld [vmem:[%s600] sm:$0xf]
        %v603 = vsel %vm306, %v601, 0
        %v605 = vsel %vm310, %v587, 0
        %v607 = vsel %vm310, %v588, 0
        %609 = vmatprep.subr.mxu0 %v607
        %610 = vmatpush1.msra.mxu0 %v605
        %611 = vmatprep.subr.mxu0 0.0
        %612 = vmatpush1.msra.mxu0 0.0
        %613 = vmatprep.subr.mxu0 0.0
        %614 = vmatpush1.msra.mxu0 0.0
        %615 = vmatprep.subr.mxu0 0.0
        %616 = vmatpush1.msra.mxu0 0.0
        %617 = vmatprep.subr.mxu0 0.0
        %618 = vmatpush1.msra.mxu0 0.0
        %619 = vmatprep.subr.mxu0 0.0
        %620 = vmatpush1.msra.mxu0 0.0
        %621 = vmatprep.subr.mxu0 0.0
        %622 = vmatpush1.msra.mxu0 0.0
        %623 = vmatprep.subr.mxu0 0.0
        %624 = vmatpush1.msra.mxu0 0.0
        %625 = vmatprep.subr.mxu0 0.0
        %626 = vmatpush1.msra.mxu0 0.0
        %627 = vmatprep.subr.mxu0 0.0
        %628 = vmatpush1.msra.mxu0 0.0
        %629 = vmatprep.subr.mxu0 0.0
        %630 = vmatpush1.msra.mxu0 0.0
        %631 = vmatprep.subr.mxu0 0.0
        %632 = vmatpush1.msra.mxu0 0.0
        %633 = vmatprep.subr.mxu0 0.0
        %634 = vmatpush1.msra.mxu0 0.0
        %635 = vmatprep.subr.mxu0 0.0
        %636 = vmatpush1.msra.mxu0 0.0
        %637 = vmatprep.subr.mxu0 0.0
        %638 = vmatpush1.msra.mxu0 0.0
        %639 = vmatprep.subr.mxu0 0.0
        %640 = vmatpush1.msra.mxu0 0.0
        %641 = vmatprep.subr.mxu0 0.0
        %642 = vmatpush1.msra.mxu0 0.0
        %643 = vmatprep.subr.mxu0 0.0
        %644 = vmatpush1.msra.mxu0 0.0
        %645 = vmatprep.subr.mxu0 0.0
        %646 = vmatpush1.msra.mxu0 0.0
        %647 = vmatprep.subr.mxu0 0.0
        %648 = vmatpush1.msra.mxu0 0.0
        %649 = vmatprep.subr.mxu0 0.0
        %650 = vmatpush1.msra.mxu0 0.0
        %651 = vmatprep.subr.mxu0 0.0
        %652 = vmatpush1.msra.mxu0 0.0
        %653 = vmatprep.subr.mxu0 0.0
        %654 = vmatpush1.msra.mxu0 0.0
        %655 = vmatprep.subr.mxu0 0.0
        %656 = vmatpush1.msra.mxu0 0.0
        %657 = vmatprep.subr.mxu0 0.0
        %658 = vmatpush1.msra.mxu0 0.0
        %659 = vmatprep.subr.mxu0 0.0
        %660 = vmatpush1.msra.mxu0 0.0
        %661 = vmatprep.subr.mxu0 0.0
        %662 = vmatpush1.msra.mxu0 0.0
        %663 = vmatprep.subr.mxu0 0.0
        %664 = vmatpush1.msra.mxu0 0.0
        %665 = vmatprep.subr.mxu0 0.0
        %666 = vmatpush1.msra.mxu0 0.0
        %667 = vmatprep.subr.mxu0 0.0
        %668 = vmatpush1.msra.mxu0 0.0
        %669 = vmatprep.subr.mxu0 0.0
        %670 = vmatpush1.msra.mxu0 0.0
        %671 = vmatprep.subr.mxu0 0.0
        %672 = vmatpush1.msra.mxu0 0.0
        %673 = vmatprep.mubr.f32.mxu0 0.0
        %674 = vmatmul.mubr.f32.gmra.mrb[0].mxu0 %v603
        %v675 = vpop.f32.mrb[0].mxu0
        %v676 = vadd.f32 0.0, %v675
        %v677 = vpop.f32.mrb[0].mxu0
        %v678 = vadd.f32 0.0, %v677
        %679 = vdwg.mxu0
        %v681 = vsel %vm306, %v599, 0
        %v684 = vsel %vm310, %v598, 0
        %v686 = vsel %vm310, %v596, 0
        %688 = vmatprep.subr.mxu0 %v686
        %689 = vmatpush1.msra.mxu0 %v684
        %690 = vmatprep.subr.mxu0 0.0
        %691 = vmatpush1.msra.mxu0 0.0
        %692 = vmatprep.subr.mxu0 0.0
        %693 = vmatpush1.msra.mxu0 0.0
        %694 = vmatprep.subr.mxu0 0.0
        %695 = vmatpush1.msra.mxu0 0.0
        %696 = vmatprep.subr.mxu0 0.0
        %697 = vmatpush1.msra.mxu0 0.0
        %698 = vmatprep.subr.mxu0 0.0
        %699 = vmatpush1.msra.mxu0 0.0
        %700 = vmatprep.subr.mxu0 0.0
        %701 = vmatpush1.msra.mxu0 0.0
        %702 = vmatprep.subr.mxu0 0.0
        %703 = vmatpush1.msra.mxu0 0.0
        %704 = vmatprep.subr.mxu0 0.0
        %705 = vmatpush1.msra.mxu0 0.0
        %706 = vmatprep.subr.mxu0 0.0
        %707 = vmatpush1.msra.mxu0 0.0
        %708 = vmatprep.subr.mxu0 0.0
        %709 = vmatpush1.msra.mxu0 0.0
        %710 = vmatprep.subr.mxu0 0.0
        %711 = vmatpush1.msra.mxu0 0.0
        %712 = vmatprep.subr.mxu0 0.0
        %713 = vmatpush1.msra.mxu0 0.0
        %714 = vmatprep.subr.mxu0 0.0
        %715 = vmatpush1.msra.mxu0 0.0
        %716 = vmatprep.subr.mxu0 0.0
        %717 = vmatpush1.msra.mxu0 0.0
        %718 = vmatprep.subr.mxu0 0.0
        %719 = vmatpush1.msra.mxu0 0.0
        %720 = vmatprep.subr.mxu0 0.0
        %721 = vmatpush1.msra.mxu0 0.0
        %722 = vmatprep.subr.mxu0 0.0
        %723 = vmatpush1.msra.mxu0 0.0
        %724 = vmatprep.subr.mxu0 0.0
        %725 = vmatpush1.msra.mxu0 0.0
        %726 = vmatprep.subr.mxu0 0.0
        %727 = vmatpush1.msra.mxu0 0.0
        %728 = vmatprep.subr.mxu0 0.0
        %729 = vmatpush1.msra.mxu0 0.0
        %730 = vmatprep.subr.mxu0 0.0
        %731 = vmatpush1.msra.mxu0 0.0
        %732 = vmatprep.subr.mxu0 0.0
        %733 = vmatpush1.msra.mxu0 0.0
        %734 = vmatprep.subr.mxu0 0.0
        %735 = vmatpush1.msra.mxu0 0.0
        %736 = vmatprep.subr.mxu0 0.0
        %737 = vmatpush1.msra.mxu0 0.0
        %738 = vmatprep.subr.mxu0 0.0
        %739 = vmatpush1.msra.mxu0 0.0
        %740 = vmatprep.subr.mxu0 0.0
        %741 = vmatpush1.msra.mxu0 0.0
        %742 = vmatprep.subr.mxu0 0.0
        %743 = vmatpush1.msra.mxu0 0.0
        %744 = vmatprep.subr.mxu0 0.0
        %745 = vmatpush1.msra.mxu0 0.0
        %746 = vmatprep.subr.mxu0 0.0
        %747 = vmatpush1.msra.mxu0 0.0
        %748 = vmatprep.subr.mxu0 0.0
        %749 = vmatpush1.msra.mxu0 0.0
        %750 = vmatprep.subr.mxu0 0.0
        %751 = vmatpush1.msra.mxu0 0.0
        %752 = vmatprep.mubr.f32.mxu0 0.0
        %753 = vmatmul.mubr.f32.gmra.mrb[0].mxu0 %v681
        %v754 = vpop.f32.mrb[0].mxu0
        %v755 = vadd.f32 %v676, %v754
        %v756 = vpop.f32.mrb[0].mxu0
        %v757 = vadd.f32 %v678, %v756
        %758 = vdwg.mxu0
        %759 = vrot.lane.b32.xlu0 %v587, 112
        %v760 = vpop.permute.xlu0 %759
        %761 = vrot.lane.b32.xlu0 %v588, 112
        %v762 = vpop.permute.xlu0 %761
        %vm763 = vcmask 916480
        %v764 = vsel %vm763, %v760, %v762
        %v766 = vsel %vm763, %v762, 0.0
        %s767 = scalar_lea.vmem [#allocation5], 8
        %v768 = vld [vmem:[%s767] sm:$0xf]
        %v770 = vsel %vm306, %v768, 0
        %v772 = vsel %vm310, %v764, 0
        %v775 = vsel %vm310, %v766, 0
        %777 = vmatprep.subr.mxu0 %v775
        %778 = vmatpush1.msra.mxu0 %v772
        %779 = vmatprep.subr.mxu0 0.0
        %780 = vmatpush1.msra.mxu0 0.0
        %781 = vmatprep.subr.mxu0 0.0
        %782 = vmatpush1.msra.mxu0 0.0
        %783 = vmatprep.subr.mxu0 0.0
        %784 = vmatpush1.msra.mxu0 0.0
        %785 = vmatprep.subr.mxu0 0.0
        %786 = vmatpush1.msra.mxu0 0.0
        %787 = vmatprep.subr.mxu0 0.0
        %788 = vmatpush1.msra.mxu0 0.0
        %789 = vmatprep.subr.mxu0 0.0
        %790 = vmatpush1.msra.mxu0 0.0
        %791 = vmatprep.subr.mxu0 0.0
        %792 = vmatpush1.msra.mxu0 0.0
        %793 = vmatprep.subr.mxu0 0.0
        %794 = vmatpush1.msra.mxu0 0.0
        %795 = vmatprep.subr.mxu0 0.0
        %796 = vmatpush1.msra.mxu0 0.0
        %797 = vmatprep.subr.mxu0 0.0
        %798 = vmatpush1.msra.mxu0 0.0
        %799 = vmatprep.subr.mxu0 0.0
        %800 = vmatpush1.msra.mxu0 0.0
        %801 = vmatprep.subr.mxu0 0.0
        %802 = vmatpush1.msra.mxu0 0.0
        %803 = vmatprep.subr.mxu0 0.0
        %804 = vmatpush1.msra.mxu0 0.0
        %805 = vmatprep.subr.mxu0 0.0
        %806 = vmatpush1.msra.mxu0 0.0
        %807 = vmatprep.subr.mxu0 0.0
        %808 = vmatpush1.msra.mxu0 0.0
        %809 = vmatprep.subr.mxu0 0.0
        %810 = vmatpush1.msra.mxu0 0.0
        %811 = vmatprep.subr.mxu0 0.0
        %812 = vmatpush1.msra.mxu0 0.0
        %813 = vmatprep.subr.mxu0 0.0
        %814 = vmatpush1.msra.mxu0 0.0
        %815 = vmatprep.subr.mxu0 0.0
        %816 = vmatpush1.msra.mxu0 0.0
        %817 = vmatprep.subr.mxu0 0.0
        %818 = vmatpush1.msra.mxu0 0.0
        %819 = vmatprep.subr.mxu0 0.0
        %820 = vmatpush1.msra.mxu0 0.0
        %821 = vmatprep.subr.mxu0 0.0
        %822 = vmatpush1.msra.mxu0 0.0
        %823 = vmatprep.subr.mxu0 0.0
        %824 = vmatpush1.msra.mxu0 0.0
        %825 = vmatprep.subr.mxu0 0.0
        %826 = vmatpush1.msra.mxu0 0.0
        %827 = vmatprep.subr.mxu0 0.0
        %828 = vmatpush1.msra.mxu0 0.0
        %829 = vmatprep.subr.mxu0 0.0
        %830 = vmatpush1.msra.mxu0 0.0
        %831 = vmatprep.subr.mxu0 0.0
        %832 = vmatpush1.msra.mxu0 0.0
        %833 = vmatprep.subr.mxu0 0.0
        %834 = vmatpush1.msra.mxu0 0.0
        %835 = vmatprep.subr.mxu0 0.0
        %836 = vmatpush1.msra.mxu0 0.0
        %837 = vmatprep.subr.mxu0 0.0
        %838 = vmatpush1.msra.mxu0 0.0
        %839 = vmatprep.subr.mxu0 0.0
        %840 = vmatpush1.msra.mxu0 0.0
        %841 = vmatprep.mubr.f32.mxu0 0.0
        %842 = vmatmul.mubr.f32.gmra.mrb[0].mxu0 %v770
        %v843 = vpop.f32.mrb[0].mxu0
        %v844 = vadd.f32 0.0, %v843
        %v845 = vpop.f32.mrb[0].mxu0
        %v846 = vadd.f32 0.0, %v845
        %847 = vdwg.mxu0
        %v848 = vadd.f32 %v755, %v844
        %v849 = vadd.f32 %v757, %v846
        %v850 = vld [vmem:[%s4] sm:$0xf]
        %852 = vset.pattern.permute.xlu0 0
        %853 = vperm.xlu0 %852, %v850
        %v854 = vpop.permute.xlu0 %853
        %v856 = vadd.f32 %v848, %v854
        %v857 = vadd.f32 %v849, %v854
        %v858 = vxor.u32 %v856, 2147483648
        %v859 = vxor.u32 %v857, 2147483648
        %v860 = vmul.f32 %v858, 1.442695
        %v861 = vpow.pop %v860
        %v862 = vmul.f32 %v859, 1.442695
        %v863 = vpow.pop %v862
        %v864 = vadd.f32 %v861, 1.0
        %v865 = vadd.f32 %v863, 1.0
        %v866 = vrcp.pop %v864
        %v867 = vmul.f32 1.0, %v866
        %v868 = vrcp.pop %v865
        %v869 = vmul.f32 1.0, %v868
        %v870 = vmul.f32 %v856, %v867
        %v871 = vmul.f32 %v857, %v869
        %v874 = vcombine.low %v870, %v871
        %876 = vst [vmem:[%s255] sm:$0xff] %v874
        %s877 = sand.u32 %s141, 1
        %s878 = scalar_lea.sflag [#allocation4], %s877
        %s879 = sand.u32 %s141, 1
        %s880 = smul.addr %s879, 8
        %s881 = scalar_lea.vmem [#allocation7], %s880
        // Predicated region
        $region49: #{tpu_custom_call.1} parent=39 // pred_check
          %p882 = pneg %p151
        $region50: #{tpu_custom_call.1} parent=39 // pred_check_branch
          %884 = sbr.rel (%p882) target = $region52
        $region51: #{tpu_custom_call.1} parent=39 // pred_region
          %s886 = ssub.s32 128, 128
          %887 = vsyncadd %s878, %s886
          %s888 = smul.addr %s23, 2
          %s889 = smul.addr %s888, 64
          %s890 = scalar_lea.hbm %s5, %s889
          %s892 = sshll.u32 %s881, 4
          %s893 = int_to_ptr.vmem [resolvable:$true] %s892
          %895 = dma.vmem_to_hbm [thread:$0]  %s893, 128, %s890, %s878
        $region52: #{tpu_custom_call.1} parent=39 // pred_fallthru
          _
      $region40: #{tpu_custom_call.1} parent=5 // pred_fallthru
        _
      %p896 = scmp.le.s32.totalorder 2, %s18
      // Predicated region
      $region53: #{tpu_custom_call.1} parent=5 // pred_check
        %p897 = pneg %p896
      $region54: #{tpu_custom_call.1} parent=5 // pred_check_branch
        %899 = sbr.rel (%p897) target = $region56
      $region55: #{tpu_custom_call.1} parent=5 // pred_region
        %s900 = ssub.s32 %s18, 2
        // Predicated region
        $region57: #{tpu_custom_call.1} parent=55 // pred_check
          %p901 = pneg %p157
        $region58: #{tpu_custom_call.1} parent=55 // pred_check_branch
          %903 = sbr.rel (%p901) target = $region60
        $region59: #{tpu_custom_call.1} parent=55 // pred_region
          %s904 = sand.u32 %s142, 1
          %s905 = scalar_lea.sflag [#allocation4], %s904
          %s906 = sand.u32 %s142, 1
          %s907 = smul.addr %s906, 8
          %s908 = scalar_lea.vmem [#allocation7], %s907
          %909 = dma.done %s905, 128
        $region60: #{tpu_custom_call.1} parent=55 // pred_fallthru
          _
      $region56: #{tpu_custom_call.1} parent=5 // pred_fallthru
        _
    $region6: #{tpu_custom_call.1} parent=1 // loop_footer
      %s22 = sadd.s32 1, %s18
    $region7: #{tpu_custom_call.1} parent=1 // loop_footer_branch
      %17 = sbr.rel target = $region3
    $region8: #{tpu_custom_call.1} parent=1 // loop_exit
      _
    %910 = vsyncpa [#allocation3], 1
    %s911 = scalar_lea.sflag [#allocation3], 1
    %912 = vsyncpa %s911, 1
    %913 = vsyncpa [#allocation6], 1
    %914 = vsyncpa [#allocation4], 1
    %s915 = scalar_lea.sflag [#allocation4], 1
    %916 = vsyncpa %s915, 1

</llo_original>
